<compile_context>
chip_gen: v5e
topology: v5e:2x2
jax: 0.10.0
libtpu: 0.0.40
codegen_flags: <defaults>
</compile_context>

<pallas_src>
import functools

import jax
import jax.numpy as jnp
from jax.experimental import pallas as pl
from jax.experimental.pallas import tpu as pltpu


def _round_up(a, b):
    return ((a + b - 1) // b) * b


def dense_block_kernel(x_ref, scale_ref, shift_ref, w_ref, b_ref, o_ref):
    # Fused: folded-BN affine + ReLU + collapsed Linear chain (single MXU matmul).
    h = jnp.maximum(x_ref[...] * scale_ref[...] + shift_ref[...], 0.0)
    acc = jnp.dot(h, w_ref[...], preferred_element_type=jnp.float32) + b_ref[...]
    o_ref[...] = acc.astype(o_ref.dtype)


def prepare_params(bn_params, linear_params, C=64, L=15):
    """One-time prep (outside the per-call jit): fold BN, collapse the Linear chain."""
    gamma, beta, run_mean, run_var = bn_params
    eps = 1e-5
    # Eval-mode BatchNorm1d -> per-channel affine, broadcast to the channel-major
    # flattened feature axis (matches torch.flatten of an NCL tensor).
    scale_c = gamma / jnp.sqrt(run_var + eps)                  # (C,)
    shift_c = beta - run_mean * scale_c                        # (C,)
    scale = jnp.broadcast_to(scale_c[:, None], (C, L)).reshape(1, C * L)
    shift = jnp.broadcast_to(shift_c[:, None], (C, L)).reshape(1, C * L)

    # Collapse the activation-free Linear chain:
    #   y = W6(W5(...(W1 x + b1)...) + b5) + b6  ==  W_eff x + b_eff
    hp = jax.lax.Precision.HIGHEST
    w, b = linear_params[0]                                    # (512, 960), (512,)
    W_acc, b_acc = w, b
    for (wi, bi) in linear_params[1:]:
        W_acc = jnp.dot(wi, W_acc, precision=hp)               # (out_i, 960)
        b_acc = jnp.dot(wi, b_acc, precision=hp) + bi          # (out_i,)
    w_eff = W_acc.T                                            # (960, 2)  (in, out)
    b_eff = b_acc.reshape(1, -1)                               # (1, 2)
    return (jnp.asarray(scale, jnp.float32), jnp.asarray(shift, jnp.float32),
            jnp.asarray(w_eff, jnp.float32), jnp.asarray(b_eff, jnp.float32))


@functools.partial(jax.jit, static_argnames=("tile_rows",))
def dense_block_forward(x, scale, shift, w_eff, b_eff, tile_rows=2048):
    """x: (N, 64, 15) float32.  Returns (N, 2) float32 (logits; no softmax in forward)."""
    N, C, L = x.shape
    F = C * L                                   # 960
    O = w_eff.shape[1]                          # 2
    x_flat = x.reshape(N, F)                    # contiguous reshape, no copy

    # --- batch tiling: no padding, ragged last block, v7x-balanced tile count ---
    tile_rows = max(8, _round_up(tile_rows, 8))          # guard (8,128) block rule
    N8 = _round_up(N, 8)
    num_tiles = pl.cdiv(N8, tile_rows)
    # Even tile count so the "parallel" axis load-balances across v7x's 2 TCs.
    # Only split a lone tile when there is real work for both cores.
    if num_tiles % 2 == 1 and (num_tiles > 1 or N8 >= 1024):
        num_tiles += 1
    tile = min(_round_up(pl.cdiv(N8, num_tiles), 8), tile_rows)
    grid = (pl.cdiv(N, tile),)                  # last block may be ragged (masked writes)

    out = pl.pallas_call(
        dense_block_kernel,
        out_shape=jax.ShapeDtypeStruct((N, O), jnp.float32),
        grid=grid,
        in_specs=[
            pl.BlockSpec((tile, F), lambda i: (i, 0)),   # activations: streamed per tile
            pl.BlockSpec((1, F), lambda i: (0, 0)),      # scale: VMEM-resident
            pl.BlockSpec((1, F), lambda i: (0, 0)),      # shift: VMEM-resident
            pl.BlockSpec((F, O), lambda i: (0, 0)),      # collapsed weight: resident
            pl.BlockSpec((1, O), lambda i: (0, 0)),      # collapsed bias: resident
        ],
        out_specs=pl.BlockSpec((tile, O), lambda i: (i, 0)),
        compiler_params=pltpu.CompilerParams(
            dimension_semantics=("parallel",),           # shard batch across TCs (v7x)
            vmem_limit_bytes=32 * 1024 * 1024,           # safe on v5e/v6e/v7x
        ),
    )(x_flat, scale, shift, w_eff, b_eff)
    return out


def init_params(key):
    """Deterministic init mirroring the PyTorch module's parameter shapes."""
    C = 64
    dims = [960, 512, 256, 128, 64, 32, 2]

    k_bn, key = jax.random.split(key)
    # BatchNorm1d(64): weight, bias, running_mean, running_var.
    gamma = jnp.ones((C,), jnp.float32)
    beta = jnp.zeros((C,), jnp.float32)
    run_mean = 0.1 * jax.random.normal(k_bn, (C,), jnp.float32)
    run_var = jnp.ones((C,), jnp.float32) + 0.05 * jax.random.uniform(k_bn, (C,))
    bn_params = (gamma, beta, run_mean, run_var)

    linear_params = []
    for i in range(6):
        fan_in, fan_out = dims[i], dims[i + 1]
        key, kw, kb = jax.random.split(key, 3)
        bound = 1.0 / (fan_in ** 0.5)
        w = jax.random.uniform(kw, (fan_out, fan_in), jnp.float32, -bound, bound)
        b = jax.random.uniform(kb, (fan_out,), jnp.float32, -bound, bound)
        linear_params.append((w, b))
    return bn_params, linear_params


def reference_forward(x, bn_params, linear_params):
    """Pure-JAX layer-by-layer reference (faithful to the PyTorch module)."""
    gamma, beta, run_mean, run_var = bn_params
    eps = 1e-5
    hp = jax.lax.Precision.HIGHEST
    xn = (x - run_mean[None, :, None]) / jnp.sqrt(run_var + eps)[None, :, None]
    xn = xn * gamma[None, :, None] + beta[None, :, None]
    h = jnp.maximum(xn, 0.0).reshape(x.shape[0], -1)
    for (w, b) in linear_params:
        h = jnp.dot(h, w.T, precision=hp) + b
    return h


if __name__ == "__main__":
    key = jax.random.PRNGKey(0)
    k_x, k_p, k_x2, k_x3 = jax.random.split(key, 4)

    # Input implied by BatchNorm1d(64) + Flatten -> 960 features: (N, 64, 15).
    N, C, L = 2, 64, 15
    x = jax.random.normal(k_x, (N, C, L), jnp.float32)

    bn_params, linear_params = init_params(k_p)
    prepared = prepare_params(bn_params, linear_params, C=C, L=L)  # once, outside jit

    # Tolerance note: the kernel evaluates the mathematically identical collapsed
    # affine chain; small f32/MXU rounding differences vs the layer-by-layer
    # reference are expected, real bugs would be O(1e-1).
    out = jax.block_until_ready(dense_block_forward(x, *prepared))
    ref = reference_forward(x, bn_params, linear_params)
    assert out.shape == (N, 2)
    assert jnp.allclose(out, ref, atol=1e-3, rtol=1e-3), "mismatch vs reference (small batch)"

    # Larger batch: exercises multiple tiles, even tile count, ragged last block.
    N2 = 2088
    x2 = jax.random.normal(k_x2, (N2, C, L), jnp.float32)
    out2 = jax.block_until_ready(dense_block_forward(x2, *prepared))
    ref2 = reference_forward(x2, bn_params, linear_params)
    assert out2.shape == (N2, 2)
    assert jnp.allclose(out2, ref2, atol=1e-3, rtol=1e-3), "mismatch vs reference (large batch)"

    # Mid-size batch: exercises the lone-tile -> 2-tile split (v7x balance) + ragged edge.
    N3 = 1500
    x3 = jax.random.normal(k_x3, (N3, C, L), jnp.float32)
    out3 = jax.block_until_ready(dense_block_forward(x3, *prepared))
    ref3 = reference_forward(x3, bn_params, linear_params)
    assert out3.shape == (N3, 2)
    assert jnp.allclose(out3, ref3, atol=1e-3, rtol=1e-3), "mismatch vs reference (mid batch)"

    print("KERNEL_OK")
</pallas_src>

<mosaic_0001>
module attributes {stable_mosaic.version = 11 : i64} {
  func.func @dense_block_kernel(%arg0: i32, %arg1: memref<8x960xf32, #tpu.memory_space<vmem>>, %arg2: memref<1x960xf32, #tpu.memory_space<vmem>>, %arg3: memref<1x960xf32, #tpu.memory_space<vmem>>, %arg4: memref<960x2xf32, #tpu.memory_space<vmem>>, %arg5: memref<1x2xf32, #tpu.memory_space<vmem>>, %arg6: memref<8x2xf32, #tpu.memory_space<vmem>>) attributes {dimension_semantics = [#tpu.dimension_semantics<parallel>], iteration_bounds = array<i64: 1>, scalar_prefetch = 0 : i64, scratch_operands = 0 : i64, tpu.core_type = #tpu.core_type<tc>, window_params = [{transform_indices = @transform_0, window_bounds = array<i64: 8, 960>}, {pipeline_mode = #tpu.pipeline_mode<synchronous>, transform_indices = @transform_1, window_bounds = array<i64: 1, 960>}, {pipeline_mode = #tpu.pipeline_mode<synchronous>, transform_indices = @transform_2, window_bounds = array<i64: 1, 960>}, {pipeline_mode = #tpu.pipeline_mode<synchronous>, transform_indices = @transform_3, window_bounds = array<i64: 960, 2>}, {pipeline_mode = #tpu.pipeline_mode<synchronous>, transform_indices = @transform_4, window_bounds = array<i64: 1, 2>}, {transform_indices = @transform_5, window_bounds = array<i64: 8, 2>}]} {
    %c0 = arith.constant 0 : index
    %c0_0 = arith.constant 0 : index
    %0 = vector.load %arg1[%c0, %c0_0] : memref<8x960xf32, #tpu.memory_space<vmem>>, vector<8x960xf32>
    %c0_1 = arith.constant 0 : index
    %c0_2 = arith.constant 0 : index
    %1 = vector.load %arg2[%c0_1, %c0_2] : memref<1x960xf32, #tpu.memory_space<vmem>>, vector<1x960xf32>
    %2 = vector.broadcast %1 : vector<1x960xf32> to vector<8x960xf32>
    %3 = arith.mulf %0, %2 : vector<8x960xf32>
    %c0_3 = arith.constant 0 : index
    %c0_4 = arith.constant 0 : index
    %4 = vector.load %arg3[%c0_3, %c0_4] : memref<1x960xf32, #tpu.memory_space<vmem>>, vector<1x960xf32>
    %5 = vector.broadcast %4 : vector<1x960xf32> to vector<8x960xf32>
    %6 = arith.addf %3, %5 : vector<8x960xf32>
    %cst = arith.constant 0.000000e+00 : f32
    %7 = vector.broadcast %cst : f32 to vector<8x960xf32>
    %8 = arith.maximumf %6, %7 : vector<8x960xf32>
    %c0_5 = arith.constant 0 : index
    %c0_6 = arith.constant 0 : index
    %9 = vector.load %arg4[%c0_5, %c0_6] : memref<960x2xf32, #tpu.memory_space<vmem>>, vector<960x2xf32>
    %cst_7 = arith.constant dense<0.000000e+00> : vector<8x2xf32>
    %10 = tpu.matmul %8, %9, %cst_7 {dimension_numbers = #tpu.dot_dimension_numbers<[1], [0], [0], [1], [0, 0, 1, 1], [], []>} : vector<8x960xf32>, vector<960x2xf32>, vector<8x2xf32> -> vector<8x2xf32>
    %c0_8 = arith.constant 0 : index
    %c0_9 = arith.constant 0 : index
    %11 = vector.load %arg5[%c0_8, %c0_9] : memref<1x2xf32, #tpu.memory_space<vmem>>, vector<1x2xf32>
    %12 = vector.broadcast %11 : vector<1x2xf32> to vector<8x2xf32>
    %13 = arith.addf %10, %12 : vector<8x2xf32>
    %c0_10 = arith.constant 0 : index
    %c0_11 = arith.constant 0 : index
    %14 = vector.load %arg6[%c0_10, %c0_11] : memref<8x2xf32, #tpu.memory_space<vmem>>, vector<8x2xf32>
    tpu.vector_store %arg6[%c0_10, %c0_11], %13 {strides = array<i32>} : memref<8x2xf32, #tpu.memory_space<vmem>>, vector<8x2xf32>,
    return
  }
  func.func @transform_0(%arg0: i32) -> (i32, i32) {
    %c0_i32 = arith.constant 0 : i32
    %c0_i32_0 = arith.constant 0 : i32
    return %arg0, %c0_i32 : i32, i32
  }
  func.func @transform_1(%arg0: i32) -> (i32, i32) {
    %c0_i32 = arith.constant 0 : i32
    %c0_i32_0 = arith.constant 0 : i32
    %c0_i32_1 = arith.constant 0 : i32
    return %c0_i32, %c0_i32_0 : i32, i32
  }
  func.func @transform_2(%arg0: i32) -> (i32, i32) {
    %c0_i32 = arith.constant 0 : i32
    %c0_i32_0 = arith.constant 0 : i32
    %c0_i32_1 = arith.constant 0 : i32
    return %c0_i32, %c0_i32_0 : i32, i32
  }
  func.func @transform_3(%arg0: i32) -> (i32, i32) {
    %c0_i32 = arith.constant 0 : i32
    %c0_i32_0 = arith.constant 0 : i32
    %c0_i32_1 = arith.constant 0 : i32
    return %c0_i32, %c0_i32_0 : i32, i32
  }
  func.func @transform_4(%arg0: i32) -> (i32, i32) {
    %c0_i32 = arith.constant 0 : i32
    %c0_i32_0 = arith.constant 0 : i32
    %c0_i32_1 = arith.constant 0 : i32
    return %c0_i32, %c0_i32_0 : i32, i32
  }
  func.func @transform_5(%arg0: i32) -> (i32, i32) {
    %c0_i32 = arith.constant 0 : i32
    %c0_i32_0 = arith.constant 0 : i32
    return %arg0, %c0_i32 : i32, i32
  }
}

</mosaic_0001>

<llo_original>
// kernel: dense_block_forward.1
$region0: #{dense_block_forward.1}
  #allocation0 [shape = 'u32[]', space=smem, size = 0x4, offset = 0x4, fixed_abs, tag = 'smem constant byte address 0x4 - core index']
  #allocation1 [shape = 'u32[72,128]{1,0:T(1,128)}', space=vmem, size = 0x9000, scoped, tag = 'internal scratch']
  %s0 = inlined_call_operand.vmem [shape: f32[2,960], index: 0, kind: input, shape index: {}]
  %s1 = inlined_call_operand.vmem [shape: f32[1,960], index: 1, kind: input, shape index: {}]
  %s2 = inlined_call_operand.vmem [shape: f32[1,960], index: 2, kind: input, shape index: {}]
  %s3 = inlined_call_operand.vmem [shape: f32[960,2], index: 3, kind: input, shape index: {}]
  %s4 = inlined_call_operand.vmem [shape: f32[1,2], index: 4, kind: input, shape index: {}]
  %s5 = inlined_call_operand.hbm [shape: f32[2,2], index: 5, kind: output, shape index: {}]
  %s6 = sld [smem:[#allocation0]]
  $region30: #{dense_block_forward.1} parent=0
    _
  %s8 = ssub.s32 1, %s6
  %s9 = scalar_select 0, %s8, %s6
  $region1: #{dense_block_forward.1} parent=0
    #allocation2 [shape = 'u8[4096]{0}', space=vmem, size = 0x1000, scoped, tag = 'output window, operand 0, single buffered']
    #allocation3 [shape = 's32[1]{0}', space=sflag, size = 0x4, scoped, tag = 'scoped memory for dense_block_forward.1']
    %10 = vsyncpa [#allocation3], 0
    // Predicated region
    $region2: #{dense_block_forward.1} parent=1 // pred_check
      _
    $region3: #{dense_block_forward.1} parent=1 // pred_check_branch
      %12 = sbr.rel (0) target = $region5
    $region4: #{dense_block_forward.1} parent=1 // pred_region
      _
    $region5: #{dense_block_forward.1} parent=1 // pred_fallthru
      _
    // Predicated region
    $region6: #{dense_block_forward.1} parent=1 // pred_check
      _
    $region7: #{dense_block_forward.1} parent=1 // pred_check_branch
      %14 = sbr.rel (0) target = $region9
    $region8: #{dense_block_forward.1} parent=1 // pred_region
      _
    $region9: #{dense_block_forward.1} parent=1 // pred_fallthru
      _
    // Predicated region
    $region10: #{dense_block_forward.1} parent=1 // pred_check
      _
    $region11: #{dense_block_forward.1} parent=1 // pred_check_branch
      %16 = sbr.rel (0) target = $region13
    $region12: #{dense_block_forward.1} parent=1 // pred_region
      _
    $region13: #{dense_block_forward.1} parent=1 // pred_fallthru
      _
    // Predicated region
    $region14: #{dense_block_forward.1} parent=1 // pred_check
      _
    $region15: #{dense_block_forward.1} parent=1 // pred_check_branch
      %18 = sbr.rel (0) target = $region17
    $region16: #{dense_block_forward.1} parent=1 // pred_region
      _
    $region17: #{dense_block_forward.1} parent=1 // pred_fallthru
      _
    // Predicated region
    $region18: #{dense_block_forward.1} parent=1 // pred_check
      _
    $region19: #{dense_block_forward.1} parent=1 // pred_check_branch
      %20 = sbr.rel (0) target = $region21
    $region20: #{dense_block_forward.1} parent=1 // pred_region
      _
    $region21: #{dense_block_forward.1} parent=1 // pred_fallthru
      _
    %v21 = vld [vmem:[%s0] sm:$0xff]
    %v22 = vld [vmem:[%s0 + $0x8] sm:$0xff]
    %v23 = vld [vmem:[%s0 + $0x10] sm:$0xff]
    %v24 = vld [vmem:[%s0 + $0x18] sm:$0xff]
    %v25 = vld [vmem:[%s0 + $0x20] sm:$0xff]
    %v26 = vld [vmem:[%s0 + $0x28] sm:$0xff]
    %v27 = vld [vmem:[%s0 + $0x30] sm:$0xff]
    %v28 = vld [vmem:[%s0 + $0x38] sm:$0xff]
    %v29 = vld [vmem:[%s1] sm:$0xff]
    %v31 = vperm.slane %v29, 0
    %v32 = vperm.slane %v29, 1
    %v33 = vperm.slane %v29, 2
    %v34 = vperm.slane %v29, 3
    %v35 = vperm.slane %v29, 4
    %v36 = vperm.slane %v29, 5
    %v37 = vperm.slane %v29, 6
    %v38 = vperm.slane %v29, 7
    %v39 = vrot.slane %v32, 6
    %v40 = vrot.slane %v33, 4
    %v41 = vrot.slane %v34, 2
    %v42 = vrot.slane %v36, 6
    %v43 = vrot.slane %v37, 4
    %v44 = vrot.slane %v38, 2
    %vm45 = vcmask 1041408
    %v46 = vsel %vm45, %v31, %v39
    %vm47 = vcmask 1045508
    %v48 = vsel %vm47, %v40, %v41
    %vm49 = vcmask 1043456
    %v50 = vsel %vm49, %v46, %v48
    %v51 = vsel %vm45, %v35, %v42
    %v52 = vsel %vm47, %v43, %v44
    %v53 = vsel %vm49, %v51, %v52
    %vm54 = vcmask 1043458
    %v55 = vsel %vm54, %v31, %v39
    %vm56 = vcmask 1045504
    %v57 = vsel %vm56, %v41, %v40
    %vm58 = vcmask 1045506
    %v59 = vsel %vm58, %v55, %v57
    %v60 = vrot.slane %v59, 2
    %v61 = vsel %vm54, %v35, %v42
    %v62 = vsel %vm56, %v44, %v43
    %v63 = vsel %vm58, %v61, %v62
    %v64 = vrot.slane %v63, 2
    %v65 = vsel %vm47, %v31, %v39
    %v66 = vsel %vm45, %v40, %v41
    %v67 = vsel %vm49, %v66, %v65
    %v68 = vrot.slane %v67, 4
    %v69 = vsel %vm47, %v35, %v42
    %v70 = vsel %vm45, %v43, %v44
    %v71 = vsel %vm49, %v70, %v69
    %v72 = vrot.slane %v71, 4
    %v73 = vsel %vm56, %v39, %v31
    %v74 = vsel %vm54, %v40, %v41
    %v75 = vsel %vm58, %v74, %v73
    %v76 = vrot.slane %v75, 6
    %v77 = vsel %vm56, %v42, %v35
    %v78 = vsel %vm54, %v43, %v44
    %v79 = vsel %vm58, %v78, %v77
    %v80 = vrot.slane %v79, 6
    %v89 = vmul.f32 %v21, %v50
    %v90 = vmul.f32 %v22, %v53
    %v91 = vmul.f32 %v23, %v60
    %v92 = vmul.f32 %v24, %v64
    %v93 = vmul.f32 %v25, %v68
    %v94 = vmul.f32 %v26, %v72
    %v95 = vmul.f32 %v27, %v76
    %v96 = vmul.f32 %v28, %v80
    %v97 = vld [vmem:[%s2] sm:$0xff]
    %v99 = vperm.slane %v97, 0
    %v100 = vperm.slane %v97, 1
    %v101 = vperm.slane %v97, 2
    %v102 = vperm.slane %v97, 3
    %v103 = vperm.slane %v97, 4
    %v104 = vperm.slane %v97, 5
    %v105 = vperm.slane %v97, 6
    %v106 = vperm.slane %v97, 7
    %v107 = vrot.slane %v100, 6
    %v108 = vrot.slane %v101, 4
    %v109 = vrot.slane %v102, 2
    %v110 = vrot.slane %v104, 6
    %v111 = vrot.slane %v105, 4
    %v112 = vrot.slane %v106, 2
    %v113 = vsel %vm45, %v99, %v107
    %v114 = vsel %vm47, %v108, %v109
    %v115 = vsel %vm49, %v113, %v114
    %v116 = vsel %vm45, %v103, %v110
    %v117 = vsel %vm47, %v111, %v112
    %v118 = vsel %vm49, %v116, %v117
    %v119 = vsel %vm54, %v99, %v107
    %v120 = vsel %vm56, %v109, %v108
    %v121 = vsel %vm58, %v119, %v120
    %v122 = vrot.slane %v121, 2
    %v123 = vsel %vm54, %v103, %v110
    %v124 = vsel %vm56, %v112, %v111
    %v125 = vsel %vm58, %v123, %v124
    %v126 = vrot.slane %v125, 2
    %v127 = vsel %vm47, %v99, %v107
    %v128 = vsel %vm45, %v108, %v109
    %v129 = vsel %vm49, %v128, %v127
    %v130 = vrot.slane %v129, 4
    %v131 = vsel %vm47, %v103, %v110
    %v132 = vsel %vm45, %v111, %v112
    %v133 = vsel %vm49, %v132, %v131
    %v134 = vrot.slane %v133, 4
    %v135 = vsel %vm56, %v107, %v99
    %v136 = vsel %vm54, %v108, %v109
    %v137 = vsel %vm58, %v136, %v135
    %v138 = vrot.slane %v137, 6
    %v139 = vsel %vm56, %v110, %v103
    %v140 = vsel %vm54, %v111, %v112
    %v141 = vsel %vm58, %v140, %v139
    %v142 = vrot.slane %v141, 6
    %v151 = vadd.f32 %v89, %v115
    %v152 = vadd.f32 %v90, %v118
    %v153 = vadd.f32 %v91, %v122
    %v154 = vadd.f32 %v92, %v126
    %v155 = vadd.f32 %v93, %v130
    %v156 = vadd.f32 %v94, %v134
    %v157 = vadd.f32 %v95, %v138
    %v158 = vadd.f32 %v96, %v142
    %v159 = vmax.f32 %v151, 0.0
    %v160 = vmax.f32 %v152, 0.0
    %v161 = vmax.f32 %v153, 0.0
    %v162 = vmax.f32 %v154, 0.0
    %v163 = vmax.f32 %v155, 0.0
    %v164 = vmax.f32 %v156, 0.0
    %v165 = vmax.f32 %v157, 0.0
    %v166 = vmax.f32 %v158, 0.0
    %v167 = vld [vmem:[%s3] sm:$0xff]
    %v168 = vld [vmem:[%s3 + $0x8] sm:$0xff]
    %v169 = vld [vmem:[%s3 + $0x10] sm:$0xff]
    %v170 = vld [vmem:[%s3 + $0x18] sm:$0xff]
    %v171 = vld [vmem:[%s3 + $0x20] sm:$0xff]
    %v172 = vld [vmem:[%s3 + $0x28] sm:$0xff]
    %v173 = vld [vmem:[%s3 + $0x30] sm:$0xff]
    %v174 = vld [vmem:[%s3 + $0x38] sm:$0xff]
    %v175 = vld [vmem:[%s3 + $0x40] sm:$0xff]
    %v176 = vld [vmem:[%s3 + $0x48] sm:$0xff]
    %v177 = vld [vmem:[%s3 + $0x50] sm:$0xff]
    %v178 = vld [vmem:[%s3 + $0x58] sm:$0xff]
    %v179 = vld [vmem:[%s3 + $0x60] sm:$0xff]
    %v180 = vld [vmem:[%s3 + $0x68] sm:$0xff]
    %v181 = vld [vmem:[%s3 + $0x70] sm:$0xff]
    %v182 = vld [vmem:[%s3 + $0x78] sm:$0xff]
    %v183 = vld [vmem:[%s3 + $0x80] sm:$0xff]
    %v184 = vld [vmem:[%s3 + $0x88] sm:$0xff]
    %v185 = vld [vmem:[%s3 + $0x90] sm:$0xff]
    %v186 = vld [vmem:[%s3 + $0x98] sm:$0xff]
    %v187 = vld [vmem:[%s3 + $0xa0] sm:$0xff]
    %v188 = vld [vmem:[%s3 + $0xa8] sm:$0xff]
    %v189 = vld [vmem:[%s3 + $0xb0] sm:$0xff]
    %v190 = vld [vmem:[%s3 + $0xb8] sm:$0xff]
    %v191 = vld [vmem:[%s3 + $0xc0] sm:$0xff]
    %v192 = vld [vmem:[%s3 + $0xc8] sm:$0xff]
    %v193 = vld [vmem:[%s3 + $0xd0] sm:$0xff]
    %v194 = vld [vmem:[%s3 + $0xd8] sm:$0xff]
    %v195 = vld [vmem:[%s3 + $0xe0] sm:$0xff]
    %v196 = vld [vmem:[%s3 + $0xe8] sm:$0xff]
    %v197 = vld [vmem:[%s3 + $0xf0] sm:$0xff]
    %v198 = vld [vmem:[%s3 + $0xf8] sm:$0xff]
    %v199 = vld [vmem:[%s3 + $0x100] sm:$0xff]
    %v200 = vld [vmem:[%s3 + $0x108] sm:$0xff]
    %v201 = vld [vmem:[%s3 + $0x110] sm:$0xff]
    %v202 = vld [vmem:[%s3 + $0x118] sm:$0xff]
    %v203 = vld [vmem:[%s3 + $0x120] sm:$0xff]
    %v204 = vld [vmem:[%s3 + $0x128] sm:$0xff]
    %v205 = vld [vmem:[%s3 + $0x130] sm:$0xff]
    %v206 = vld [vmem:[%s3 + $0x138] sm:$0xff]
    %v207 = vld [vmem:[%s3 + $0x140] sm:$0xff]
    %v208 = vld [vmem:[%s3 + $0x148] sm:$0xff]
    %v209 = vld [vmem:[%s3 + $0x150] sm:$0xff]
    %v210 = vld [vmem:[%s3 + $0x158] sm:$0xff]
    %v211 = vld [vmem:[%s3 + $0x160] sm:$0xff]
    %v212 = vld [vmem:[%s3 + $0x168] sm:$0xff]
    %v213 = vld [vmem:[%s3 + $0x170] sm:$0xff]
    %v214 = vld [vmem:[%s3 + $0x178] sm:$0xff]
    %v215 = vld [vmem:[%s3 + $0x180] sm:$0xff]
    %v216 = vld [vmem:[%s3 + $0x188] sm:$0xff]
    %v217 = vld [vmem:[%s3 + $0x190] sm:$0xff]
    %v218 = vld [vmem:[%s3 + $0x198] sm:$0xff]
    %v219 = vld [vmem:[%s3 + $0x1a0] sm:$0xff]
    %v220 = vld [vmem:[%s3 + $0x1a8] sm:$0xff]
    %v221 = vld [vmem:[%s3 + $0x1b0] sm:$0xff]
    %v222 = vld [vmem:[%s3 + $0x1b8] sm:$0xff]
    %v223 = vld [vmem:[%s3 + $0x1c0] sm:$0xff]
    %v224 = vld [vmem:[%s3 + $0x1c8] sm:$0xff]
    %v225 = vld [vmem:[%s3 + $0x1d0] sm:$0xff]
    %v226 = vld [vmem:[%s3 + $0x1d8] sm:$0xff]
    %v227 = vld [vmem:[%s3 + $0x1e0] sm:$0xff]
    %v228 = vld [vmem:[%s3 + $0x1e8] sm:$0xff]
    %v229 = vld [vmem:[%s3 + $0x1f0] sm:$0xff]
    %v230 = vld [vmem:[%s3 + $0x1f8] sm:$0xff]
    %v231 = vld [vmem:[%s3 + $0x200] sm:$0xff]
    %v232 = vld [vmem:[%s3 + $0x208] sm:$0xff]
    %v233 = vld [vmem:[%s3 + $0x210] sm:$0xff]
    %v234 = vld [vmem:[%s3 + $0x218] sm:$0xff]
    %v235 = vld [vmem:[%s3 + $0x220] sm:$0xff]
    %v236 = vld [vmem:[%s3 + $0x228] sm:$0xff]
    %v237 = vld [vmem:[%s3 + $0x230] sm:$0xff]
    %v238 = vld [vmem:[%s3 + $0x238] sm:$0xff]
    %v239 = vld [vmem:[%s3 + $0x240] sm:$0xff]
    %v240 = vld [vmem:[%s3 + $0x248] sm:$0xff]
    %v241 = vld [vmem:[%s3 + $0x250] sm:$0xff]
    %v242 = vld [vmem:[%s3 + $0x258] sm:$0xff]
    %v243 = vld [vmem:[%s3 + $0x260] sm:$0xff]
    %v244 = vld [vmem:[%s3 + $0x268] sm:$0xff]
    %v245 = vld [vmem:[%s3 + $0x270] sm:$0xff]
    %v246 = vld [vmem:[%s3 + $0x278] sm:$0xff]
    %v247 = vld [vmem:[%s3 + $0x280] sm:$0xff]
    %v248 = vld [vmem:[%s3 + $0x288] sm:$0xff]
    %v249 = vld [vmem:[%s3 + $0x290] sm:$0xff]
    %v250 = vld [vmem:[%s3 + $0x298] sm:$0xff]
    %v251 = vld [vmem:[%s3 + $0x2a0] sm:$0xff]
    %v252 = vld [vmem:[%s3 + $0x2a8] sm:$0xff]
    %v253 = vld [vmem:[%s3 + $0x2b0] sm:$0xff]
    %v254 = vld [vmem:[%s3 + $0x2b8] sm:$0xff]
    %v255 = vld [vmem:[%s3 + $0x2c0] sm:$0xff]
    %v256 = vld [vmem:[%s3 + $0x2c8] sm:$0xff]
    %v257 = vld [vmem:[%s3 + $0x2d0] sm:$0xff]
    %v258 = vld [vmem:[%s3 + $0x2d8] sm:$0xff]
    %v259 = vld [vmem:[%s3 + $0x2e0] sm:$0xff]
    %v260 = vld [vmem:[%s3 + $0x2e8] sm:$0xff]
    %v261 = vld [vmem:[%s3 + $0x2f0] sm:$0xff]
    %v262 = vld [vmem:[%s3 + $0x2f8] sm:$0xff]
    %v263 = vld [vmem:[%s3 + $0x300] sm:$0xff]
    %v264 = vld [vmem:[%s3 + $0x308] sm:$0xff]
    %v265 = vld [vmem:[%s3 + $0x310] sm:$0xff]
    %v266 = vld [vmem:[%s3 + $0x318] sm:$0xff]
    %v267 = vld [vmem:[%s3 + $0x320] sm:$0xff]
    %v268 = vld [vmem:[%s3 + $0x328] sm:$0xff]
    %v269 = vld [vmem:[%s3 + $0x330] sm:$0xff]
    %v270 = vld [vmem:[%s3 + $0x338] sm:$0xff]
    %v271 = vld [vmem:[%s3 + $0x340] sm:$0xff]
    %v272 = vld [vmem:[%s3 + $0x348] sm:$0xff]
    %v273 = vld [vmem:[%s3 + $0x350] sm:$0xff]
    %v274 = vld [vmem:[%s3 + $0x358] sm:$0xff]
    %v275 = vld [vmem:[%s3 + $0x360] sm:$0xff]
    %v276 = vld [vmem:[%s3 + $0x368] sm:$0xff]
    %v277 = vld [vmem:[%s3 + $0x370] sm:$0xff]
    %v278 = vld [vmem:[%s3 + $0x378] sm:$0xff]
    %v279 = vld [vmem:[%s3 + $0x380] sm:$0xff]
    %v280 = vld [vmem:[%s3 + $0x388] sm:$0xff]
    %v281 = vld [vmem:[%s3 + $0x390] sm:$0xff]
    %v282 = vld [vmem:[%s3 + $0x398] sm:$0xff]
    %v283 = vld [vmem:[%s3 + $0x3a0] sm:$0xff]
    %v284 = vld [vmem:[%s3 + $0x3a8] sm:$0xff]
    %v285 = vld [vmem:[%s3 + $0x3b0] sm:$0xff]
    %v286 = vld [vmem:[%s3 + $0x3b8] sm:$0xff]
    %v287 = vld [vmem:[%s4] sm:$0x1]
    %v289 = vperm.slane %v287, 0
    %299 = vst [vmem:[#allocation1] ss:$4 sm:$0xff] %v159
    %s300 = scalar_lea.vmem [#allocation1], 1
    %301 = vst [vmem:[%s300] ss:$4 sm:$0xff] %v161
    %s302 = scalar_lea.vmem [#allocation1], 2
    %303 = vst [vmem:[%s302] ss:$4 sm:$0xff] %v163
    %s304 = scalar_lea.vmem [#allocation1], 3
    %305 = vst [vmem:[%s304] ss:$4 sm:$0xff] %v165
    %s306 = scalar_lea.vmem [#allocation1], 32
    %307 = vst [vmem:[%s306] ss:$4 sm:$0xff] %v160
    %s308 = scalar_lea.vmem [#allocation1], 33
    %309 = vst [vmem:[%s308] ss:$4 sm:$0xff] %v162
    %s310 = scalar_lea.vmem [#allocation1], 34
    %311 = vst [vmem:[%s310] ss:$4 sm:$0xff] %v164
    %s312 = scalar_lea.vmem [#allocation1], 35
    %313 = vst [vmem:[%s312] ss:$4 sm:$0xff] %v166
    %v314 = vld.sshfl [vmem:[#allocation1] sm:$0xff pattern:$0x73625140]
    %v315 = vld.sshfl [vmem:[#allocation1 + $0x8] sm:$0xff pattern:$0x73625140]
    %v316 = vld.sshfl [vmem:[#allocation1 + $0x10] sm:$0xff pattern:$0x73625140]
    %v317 = vld.sshfl [vmem:[#allocation1 + $0x18] sm:$0xff pattern:$0x73625140]
    %v318 = vld.sshfl [vmem:[#allocation1 + $0x20] sm:$0xff pattern:$0x73625140]
    %v319 = vld.sshfl [vmem:[#allocation1 + $0x28] sm:$0xff pattern:$0x73625140]
    %v320 = vld.sshfl [vmem:[#allocation1 + $0x30] sm:$0xff pattern:$0x73625140]
    %v321 = vld.sshfl [vmem:[#allocation1 + $0x38] sm:$0xff pattern:$0x73625140]
    %vm329 = vcmask 523264
    %v330 = vsel %vm329, %v321, 0
    %332 = vmatpush.msra.mxu0 %v182
    %333 = vmatpush.msra.mxu0 %v181
    %334 = vmatpush.msra.mxu0 %v180
    %335 = vmatpush.msra.mxu0 %v179
    %336 = vmatpush.msra.mxu0 %v178
    %337 = vmatpush.msra.mxu0 %v177
    %338 = vmatpush.msra.mxu0 %v176
    %339 = vmatpush.msra.mxu0 %v175
    %340 = vmatpush.msra.mxu0 %v174
    %341 = vmatpush.msra.mxu0 %v173
    %342 = vmatpush.msra.mxu0 %v172
    %343 = vmatpush.msra.mxu0 %v171
    %344 = vmatpush.msra.mxu0 %v170
    %345 = vmatpush.msra.mxu0 %v169
    %346 = vmatpush.msra.mxu0 %v168
    %347 = vmatpush.msra.mxu0 %v167
    %348 = vmatmul.f32.gmra.mxu0 %v314
    %v349 = vpop.f32.mrf.mxu0
    %v350 = vadd.f32 %v289, %v349
    %351 = vdwg.mxu0
    %352 = vmatpush.msra.mxu0 %v198
    %353 = vmatpush.msra.mxu0 %v197
    %354 = vmatpush.msra.mxu0 %v196
    %355 = vmatpush.msra.mxu0 %v195
    %356 = vmatpush.msra.mxu0 %v194
    %357 = vmatpush.msra.mxu0 %v193
    %358 = vmatpush.msra.mxu0 %v192
    %359 = vmatpush.msra.mxu0 %v191
    %360 = vmatpush.msra.mxu0 %v190
    %361 = vmatpush.msra.mxu0 %v189
    %362 = vmatpush.msra.mxu0 %v188
    %363 = vmatpush.msra.mxu0 %v187
    %364 = vmatpush.msra.mxu0 %v186
    %365 = vmatpush.msra.mxu0 %v185
    %366 = vmatpush.msra.mxu0 %v184
    %367 = vmatpush.msra.mxu0 %v183
    %368 = vmatmul.f32.gmra.mxu0 %v315
    %v369 = vpop.f32.mrf.mxu0
    %v370 = vadd.f32 %v350, %v369
    %371 = vdwg.mxu0
    %372 = vmatpush.msra.mxu0 %v214
    %373 = vmatpush.msra.mxu0 %v213
    %374 = vmatpush.msra.mxu0 %v212
    %375 = vmatpush.msra.mxu0 %v211
    %376 = vmatpush.msra.mxu0 %v210
    %377 = vmatpush.msra.mxu0 %v209
    %378 = vmatpush.msra.mxu0 %v208
    %379 = vmatpush.msra.mxu0 %v207
    %380 = vmatpush.msra.mxu0 %v206
    %381 = vmatpush.msra.mxu0 %v205
    %382 = vmatpush.msra.mxu0 %v204
    %383 = vmatpush.msra.mxu0 %v203
    %384 = vmatpush.msra.mxu0 %v202
    %385 = vmatpush.msra.mxu0 %v201
    %386 = vmatpush.msra.mxu0 %v200
    %387 = vmatpush.msra.mxu0 %v199
    %388 = vmatmul.f32.gmra.mxu0 %v316
    %v389 = vpop.f32.mrf.mxu0
    %v390 = vadd.f32 %v370, %v389
    %391 = vdwg.mxu0
    %392 = vmatpush.msra.mxu0 %v230
    %393 = vmatpush.msra.mxu0 %v229
    %394 = vmatpush.msra.mxu0 %v228
    %395 = vmatpush.msra.mxu0 %v227
    %396 = vmatpush.msra.mxu0 %v226
    %397 = vmatpush.msra.mxu0 %v225
    %398 = vmatpush.msra.mxu0 %v224
    %399 = vmatpush.msra.mxu0 %v223
    %400 = vmatpush.msra.mxu0 %v222
    %401 = vmatpush.msra.mxu0 %v221
    %402 = vmatpush.msra.mxu0 %v220
    %403 = vmatpush.msra.mxu0 %v219
    %404 = vmatpush.msra.mxu0 %v218
    %405 = vmatpush.msra.mxu0 %v217
    %406 = vmatpush.msra.mxu0 %v216
    %407 = vmatpush.msra.mxu0 %v215
    %408 = vmatmul.f32.gmra.mxu0 %v317
    %v409 = vpop.f32.mrf.mxu0
    %v410 = vadd.f32 %v390, %v409
    %411 = vdwg.mxu0
    %412 = vmatpush.msra.mxu0 %v246
    %413 = vmatpush.msra.mxu0 %v245
    %414 = vmatpush.msra.mxu0 %v244
    %415 = vmatpush.msra.mxu0 %v243
    %416 = vmatpush.msra.mxu0 %v242
    %417 = vmatpush.msra.mxu0 %v241
    %418 = vmatpush.msra.mxu0 %v240
    %419 = vmatpush.msra.mxu0 %v239
    %420 = vmatpush.msra.mxu0 %v238
    %421 = vmatpush.msra.mxu0 %v237
    %422 = vmatpush.msra.mxu0 %v236
    %423 = vmatpush.msra.mxu0 %v235
    %424 = vmatpush.msra.mxu0 %v234
    %425 = vmatpush.msra.mxu0 %v233
    %426 = vmatpush.msra.mxu0 %v232
    %427 = vmatpush.msra.mxu0 %v231
    %428 = vmatmul.f32.gmra.mxu0 %v318
    %v429 = vpop.f32.mrf.mxu0
    %v430 = vadd.f32 %v410, %v429
    %431 = vdwg.mxu0
    %432 = vmatpush.msra.mxu0 %v262
    %433 = vmatpush.msra.mxu0 %v261
    %434 = vmatpush.msra.mxu0 %v260
    %435 = vmatpush.msra.mxu0 %v259
    %436 = vmatpush.msra.mxu0 %v258
    %437 = vmatpush.msra.mxu0 %v257
    %438 = vmatpush.msra.mxu0 %v256
    %439 = vmatpush.msra.mxu0 %v255
    %440 = vmatpush.msra.mxu0 %v254
    %441 = vmatpush.msra.mxu0 %v253
    %442 = vmatpush.msra.mxu0 %v252
    %443 = vmatpush.msra.mxu0 %v251
    %444 = vmatpush.msra.mxu0 %v250
    %445 = vmatpush.msra.mxu0 %v249
    %446 = vmatpush.msra.mxu0 %v248
    %447 = vmatpush.msra.mxu0 %v247
    %448 = vmatmul.f32.gmra.mxu0 %v319
    %v449 = vpop.f32.mrf.mxu0
    %v450 = vadd.f32 %v430, %v449
    %451 = vdwg.mxu0
    %452 = vmatpush.msra.mxu0 %v278
    %453 = vmatpush.msra.mxu0 %v277
    %454 = vmatpush.msra.mxu0 %v276
    %455 = vmatpush.msra.mxu0 %v275
    %456 = vmatpush.msra.mxu0 %v274
    %457 = vmatpush.msra.mxu0 %v273
    %458 = vmatpush.msra.mxu0 %v272
    %459 = vmatpush.msra.mxu0 %v271
    %460 = vmatpush.msra.mxu0 %v270
    %461 = vmatpush.msra.mxu0 %v269
    %462 = vmatpush.msra.mxu0 %v268
    %463 = vmatpush.msra.mxu0 %v267
    %464 = vmatpush.msra.mxu0 %v266
    %465 = vmatpush.msra.mxu0 %v265
    %466 = vmatpush.msra.mxu0 %v264
    %467 = vmatpush.msra.mxu0 %v263
    %468 = vmatmul.f32.gmra.mxu0 %v320
    %v469 = vpop.f32.mrf.mxu0
    %v470 = vadd.f32 %v450, %v469
    %471 = vdwg.mxu0
    %472 = vmatpush.msra.mxu0 0.0
    %473 = vmatpush.msra.mxu0 0.0
    %474 = vmatpush.msra.mxu0 0.0
    %475 = vmatpush.msra.mxu0 0.0
    %476 = vmatpush.msra.mxu0 0.0
    %477 = vmatpush.msra.mxu0 0.0
    %478 = vmatpush.msra.mxu0 0.0
    %479 = vmatpush.msra.mxu0 0.0
    %480 = vmatpush.msra.mxu0 %v286
    %481 = vmatpush.msra.mxu0 %v285
    %482 = vmatpush.msra.mxu0 %v284
    %483 = vmatpush.msra.mxu0 %v283
    %484 = vmatpush.msra.mxu0 %v282
    %485 = vmatpush.msra.mxu0 %v281
    %486 = vmatpush.msra.mxu0 %v280
    %487 = vmatpush.msra.mxu0 %v279
    %488 = vmatmul.f32.gmra.mxu0 %v330
    %v489 = vpop.f32.mrf.mxu0
    %v490 = vadd.f32 %v470, %v489
    %491 = vdwg.mxu0
    %vm492 = vcmask 15360
    %493 = vst.msk [vmem:[#allocation2] sm:$0xff] %vm492, %v490
    // Predicated region
    $region22: #{dense_block_forward.1} parent=1 // pred_check
      _
    $region23: #{dense_block_forward.1} parent=1 // pred_check_branch
      %495 = sbr.rel (0) target = $region25
    $region24: #{dense_block_forward.1} parent=1 // pred_region
      %497 = vsyncadd [#allocation3], 96
      %s498 = sshll.u32 [#allocation2], 4
      %s499 = int_to_ptr.vmem [resolvable:$true] %s498
      %s500 = sshll.u32 %s5, 4
      %s501 = int_to_ptr.hbm [resolvable:$true] %s500
      %506 = dma.vmem_to_hbm [thread:$0]  %s499, 32, %s501, [#allocation3], 32, 32, 2
    $region25: #{dense_block_forward.1} parent=1 // pred_fallthru
      _
    // Predicated region
    $region26: #{dense_block_forward.1} parent=1 // pred_check
      _
    $region27: #{dense_block_forward.1} parent=1 // pred_check_branch
      %508 = sbr.rel (0) target = $region29
    $region28: #{dense_block_forward.1} parent=1 // pred_region
      %510 = dma.done [#allocation3], 128
    $region29: #{dense_block_forward.1} parent=1 // pred_fallthru
      _
    %511 = vsyncpa [#allocation3], 1

</llo_original>
